<compile_context>
chip_gen: v7x
topology: tpu7x:2x2x1
jax: 0.10.0
libtpu: 0.0.40
codegen_flags: <defaults>
</compile_context>

<pallas_src>
import functools

import jax
import jax.numpy as jnp
import numpy as np
from jax.experimental import pallas as pl
from jax.experimental.pallas import tpu as pltpu


# ---------------------------------------------------------------------------
# Padded VMEM accounting helpers
# ---------------------------------------------------------------------------

def _rup(x, m):
    return ((x + m - 1) // m) * m


# native sublane count of the (sublane, 128) tile per element width
_SUBLANE_FOR_ITEMSIZE = {4: 8, 2: 16, 1: 32}


def _padded_vmem_bytes(shape, itemsize):
    """Real VMEM bytes of one buffer of `shape`: last two dims padded to the
    native (sublane, 128) tile for the element width."""
    sub = _SUBLANE_FOR_ITEMSIZE.get(itemsize, 8)
    lead = 1
    for d in shape[:-2]:
        lead *= d
    return lead * _rup(shape[-2], sub) * _rup(shape[-1], 128) * itemsize


def _step_footprint_bytes(tb, c, n, in_itemsize):
    """Padded VMEM needed for one pipelined grid step at batch tile `tb`."""
    return (2 * _padded_vmem_bytes((tb, c, n), in_itemsize)   # double-buffered input
            + 2 * _padded_vmem_bytes((tb, n), 4)              # double-buffered out
            + 2 * _padded_vmem_bytes((tb, c), 4)              # double-buffered weights
            + 4 * _padded_vmem_bytes((tb, c, n), 4))          # f32 elementwise temporaries


@functools.lru_cache(maxsize=1)
def _vmem_capacity_bytes():
    try:
        return int(pltpu.get_tpu_info().vmem_capacity_bytes)
    except Exception:
        return 64 * 1024 * 1024   # conservative fallback (v7x per-TensorCore VMEM)


# ---------------------------------------------------------------------------
# Kernel
# ---------------------------------------------------------------------------

def _sweight_kernel(x_ref, out_ref, w_ref):
    # Input block may be bf16; all arithmetic / reductions are done in f32.
    x = x_ref[...].astype(jnp.float32)                 # (TB, C, N)
    _, _, n = x.shape

    # 2 * MyAvgPool1dPadSame(k=2, s=1):
    #   pooled2[i] = x[i] + (x[i+1] if i < N-1 else 0)
    # The constant factor 2 cancels in the max/sum ratio below.
    nxt = pltpu.roll(x, shift=n - 1, axis=2)           # nxt[i] = x[(i + 1) % N]
    lane = jax.lax.broadcasted_iota(jnp.int32, (1, 1, n), 2)
    keep = (lane < (n - 1)).astype(jnp.float32)        # (1, 1, N): zero only at last lane
    pooled2 = x + nxt * keep

    # ratio = max(pooled) / sum(pooled) per (batch, channel).
    # sum(pooled2) == 2*sum(x) - x[..., 0]  (analytic, saves one full-block reduction).
    # NOTE: matches the PyTorch reference exactly; an all-zero channel gives
    # NaN/Inf there as well.
    m = jnp.max(pooled2, axis=2, keepdims=True)                     # (TB, C, 1)
    s = 2.0 * jnp.sum(x, axis=2, keepdims=True) - x[:, :, 0:1]      # (TB, C, 1)
    ratio = m * pl.reciprocal(s, approx=False)

    # softmax over the channel axis
    rmax = jnp.max(ratio, axis=1, keepdims=True)       # (TB, 1, 1)
    e = jnp.exp(ratio - rmax)                          # (TB, C, 1)
    w3 = e * pl.reciprocal(jnp.sum(e, axis=1, keepdims=True), approx=False)

    # weighted channel sum -> lane-dense (TB, N) store
    out_ref[...] = jnp.sum(x * w3, axis=1).astype(out_ref.dtype)
    # (TB, C, 1) -> (TB, C) via a size-1-axis reduction (exact; avoids reshape)
    w_ref[...] = jnp.sum(w3, axis=2).astype(w_ref.dtype)


# ---------------------------------------------------------------------------
# Wrapper
# ---------------------------------------------------------------------------

@functools.partial(jax.jit, static_argnames=("max_rows_per_block",))
def sweight_layer(x, *, max_rows_per_block=None):
    """x: (B, C, N) float -> (out (B, 1, N) f32, weights (B, C) f32).

    No learnable parameters.  The input keeps its dtype (bf16 halves HBM reads);
    math is f32 in-kernel.  `max_rows_per_block` is a test/tuning override.
    """
    if not jnp.issubdtype(x.dtype, jnp.floating):
        x = x.astype(jnp.float32)
    in_itemsize = int(x.dtype.itemsize)
    if in_itemsize not in _SUBLANE_FOR_ITEMSIZE:
        x = x.astype(jnp.float32)
        in_itemsize = 4
    B, C, N = x.shape

    # TODO(synk): if N ever grows so large that a (TB, C, N) slab cannot fit in
    # VMEM, the spectral axis must be tiled with a 1-element halo (pooled[i]
    # needs x[i+1]); not needed for spectral inputs (N_freq ~ 58).

    capacity = _vmem_capacity_bytes()
    # Per-step PADDED budget, generation aware.
    budget = 96 * 2**20 if capacity >= 100 * 2**20 else 44 * 2**20
    budget = min(budget, max(16 * 2**20, capacity - 16 * 2**20))

    per8 = _step_footprint_bytes(8, C, N, in_itemsize)          # footprint is linear
    tb_max = max(8, (budget // per8) * 8)                       # in tb (multiples of 8)

    # Split large batches into >= 2 blocks: DMA/compute overlap on all gens,
    # megacore sharding of the "parallel" axis on v7x.
    want_split = B >= 128
    if B <= tb_max and not want_split:
        tb = B                                                  # single full-batch block
    else:
        tb = min(tb_max, _rup(B, 8))
        if want_split:
            tb = min(tb, max(8, _rup(-(-B // 2), 8)))           # <= round8(ceil(B/2))
        tb = max(8, (tb // 8) * 8)                              # tiled => multiple of 8
        if tb >= B:
            tb = B
    if max_rows_per_block is not None and int(max_rows_per_block) < B:
        tb = min(tb, max(8, (int(max_rows_per_block) // 8) * 8))

    grid = (pl.cdiv(B, tb),)
    footprint = _step_footprint_bytes(tb, C, N, in_itemsize)
    vmem_limit = int(min(max(16 * 2**20, capacity - 8 * 2**20),
                         max(32 * 2**20, footprint + 4 * 2**20)))

    cost = pl.CostEstimate(
        flops=int(6 * B * C * N),
        transcendentals=int(B * C),
        bytes_accessed=int(B * C * N * in_itemsize + B * N * 4 + B * C * 4),
    )

    out2d, weights = pl.pallas_call(
        _sweight_kernel,
        grid=grid,
        in_specs=[pl.BlockSpec((tb, C, N), lambda i: (i, 0, 0))],
        out_specs=(
            pl.BlockSpec((tb, N), lambda i: (i, 0)),
            pl.BlockSpec((tb, C), lambda i: (i, 0)),
        ),
        out_shape=(
            jax.ShapeDtypeStruct((B, N), jnp.float32),
            jax.ShapeDtypeStruct((B, C), jnp.float32),
        ),
        compiler_params=pltpu.CompilerParams(
            dimension_semantics=("parallel",),
            vmem_limit_bytes=vmem_limit,
        ),
        cost_estimate=cost,
    )(x)

    # Restore the PyTorch output shape (B, 1, N) outside the kernel (glue).
    return out2d[:, None, :], weights


# ---------------------------------------------------------------------------
# Pure-JAX reference of the PyTorch forward (for validation)
# ---------------------------------------------------------------------------

def _reference(x):
    B, C, N = x.shape
    x_pad = jnp.concatenate([x, jnp.zeros((B, C, 1), x.dtype)], axis=-1)
    pooled = 0.5 * (x_pad[:, :, :-1] + x_pad[:, :, 1:])
    ratio = jnp.max(pooled, axis=-1) / jnp.sum(pooled, axis=-1)   # (B, C)
    w = jax.nn.softmax(ratio, axis=-1)
    out = jnp.sum(x * w[:, :, None], axis=1, keepdims=True)
    return out, w


if __name__ == "__main__":
    key = jax.random.PRNGKey(0)
    k1, k2, k3 = jax.random.split(key, 3)

    # 1) Small shape consistent with the module's spectral input (single block path).
    B, C, N = 2, 4, 16
    x = jax.random.uniform(k1, (B, C, N), dtype=jnp.float32, minval=0.1, maxval=1.0)
    out, weights = jax.block_until_ready(sweight_layer(x))
    out_ref, w_ref = _reference(x)
    np.testing.assert_allclose(np.asarray(out), np.asarray(out_ref), rtol=1e-5, atol=1e-5)
    np.testing.assert_allclose(np.asarray(weights), np.asarray(w_ref), rtol=1e-5, atol=1e-5)
    assert out.shape == (B, 1, N) and weights.shape == (B, C)

    # 2) Multi-block pipelined path with a partial final batch block (tb=8, grid=3),
    #    N_freq=58 as in the module defaults.
    B2, C2, N2 = 20, 4, 58
    x2 = jax.random.uniform(k2, (B2, C2, N2), dtype=jnp.float32, minval=0.1, maxval=1.0)
    out2, w2 = jax.block_until_ready(sweight_layer(x2, max_rows_per_block=8))
    out2_ref, w2_ref = _reference(x2)
    np.testing.assert_allclose(np.asarray(out2), np.asarray(out2_ref), rtol=1e-5, atol=1e-5)
    np.testing.assert_allclose(np.asarray(w2), np.asarray(w2_ref), rtol=1e-5, atol=1e-5)

    # 3) bf16 input path (halved HBM reads, f32 math in-kernel) + automatic >=2-block split.
    B3, C3, N3 = 160, 4, 58
    x3 = jax.random.uniform(k3, (B3, C3, N3), dtype=jnp.float32,
                            minval=0.1, maxval=1.0).astype(jnp.bfloat16)
    out3, w3 = jax.block_until_ready(sweight_layer(x3))
    out3_ref, w3_ref = _reference(x3.astype(jnp.float32))
    np.testing.assert_allclose(np.asarray(out3), np.asarray(out3_ref), rtol=5e-5, atol=5e-5)
    np.testing.assert_allclose(np.asarray(w3), np.asarray(w3_ref), rtol=5e-5, atol=5e-5)
    assert out3.shape == (B3, 1, N3) and w3.shape == (B3, C3)

    print("KERNEL_OK")
</pallas_src>

<mosaic_0001>
module attributes {stable_mosaic.version = 11 : i64} {
  func.func @_sweight_kernel(%arg0: i32, %arg1: memref<2x4x16xf32, #tpu.memory_space<vmem>>, %arg2: memref<2x16xf32, #tpu.memory_space<vmem>>, %arg3: memref<2x4xf32, #tpu.memory_space<vmem>>) attributes {dimension_semantics = [#tpu.dimension_semantics<parallel>], iteration_bounds = array<i64: 1>, scalar_prefetch = 0 : i64, scratch_operands = 0 : i64, tpu.core_type = #tpu.core_type<tc>, window_params = [{transform_indices = @transform_0, window_bounds = array<i64: 2, 4, 16>}, {transform_indices = @transform_1, window_bounds = array<i64: 2, 16>}, {transform_indices = @transform_2, window_bounds = array<i64: 2, 4>}]} {
    %c0 = arith.constant 0 : index
    %c0_0 = arith.constant 0 : index
    %c0_1 = arith.constant 0 : index
    %0 = vector.load %arg1[%c0, %c0_0, %c0_1] : memref<2x4x16xf32, #tpu.memory_space<vmem>>, vector<2x4x16xf32>
    %c15_i32 = arith.constant 15 : i32
    %1 = tpu.dynamic_rotate %0 by %c15_i32 dim 2 : vector<2x4x16xf32>, i32 -> vector<2x4x16xf32>
    %2 = tpu.iota {dimensions = array<i32: 2>} : vector<1x1x16xi32>
    %c15_i32_2 = arith.constant 15 : i32
    %3 = vector.broadcast %c15_i32_2 : i32 to vector<1x1x16xi32>
    %4 = arith.cmpi slt, %2, %3 : vector<1x1x16xi32>
    %5 = arith.extui %4 : vector<1x1x16xi1> to vector<1x1x16xi32>
    %6 = arith.sitofp %5 : vector<1x1x16xi32> to vector<1x1x16xf32>
    %7 = vector.broadcast %6 : vector<1x1x16xf32> to vector<2x4x16xf32>
    %8 = arith.mulf %1, %7 : vector<2x4x16xf32>
    %9 = arith.addf %0, %8 : vector<2x4x16xf32>
    %cst = arith.constant dense<0xFF800000> : vector<2x4xf32>
    %10 = vector.multi_reduction <maximumf>, %9, %cst [2] : vector<2x4x16xf32> to vector<2x4xf32>
    %11 = vector.shape_cast %10 : vector<2x4xf32> to vector<2x4x1xf32>
    %cst_3 = arith.constant dense<0.000000e+00> : vector<2x4xf32>
    %12 = vector.multi_reduction <add>, %0, %cst_3 [2] : vector<2x4x16xf32> to vector<2x4xf32>
    %13 = vector.shape_cast %12 : vector<2x4xf32> to vector<2x4x1xf32>
    %cst_4 = arith.constant 2.000000e+00 : f32
    %14 = vector.broadcast %cst_4 : f32 to vector<2x4x1xf32>
    %15 = arith.mulf %14, %13 : vector<2x4x1xf32>
    %16 = vector.extract_strided_slice %0 {offsets = [0, 0, 0], sizes = [2, 4, 1], strides = [1, 1, 1]} : vector<2x4x16xf32> to vector<2x4x1xf32>
    %17 = arith.subf %15, %16 : vector<2x4x1xf32>
    %18 = tpu.reciprocal %17 : vector<2x4x1xf32> -> vector<2x4x1xf32>
    %19 = arith.mulf %11, %18 : vector<2x4x1xf32>
    %cst_5 = arith.constant dense<0xFF800000> : vector<2x1xf32>
    %20 = vector.multi_reduction <maximumf>, %19, %cst_5 [1] : vector<2x4x1xf32> to vector<2x1xf32>
    %21 = vector.shape_cast %20 : vector<2x1xf32> to vector<2x1x1xf32>
    %22 = vector.broadcast %21 : vector<2x1x1xf32> to vector<2x4x1xf32>
    %23 = arith.subf %19, %22 : vector<2x4x1xf32>
    %24 = math.exp %23 : vector<2x4x1xf32>
    %cst_6 = arith.constant dense<0.000000e+00> : vector<2x1xf32>
    %25 = vector.multi_reduction <add>, %24, %cst_6 [1] : vector<2x4x1xf32> to vector<2x1xf32>
    %26 = vector.shape_cast %25 : vector<2x1xf32> to vector<2x1x1xf32>
    %27 = tpu.reciprocal %26 : vector<2x1x1xf32> -> vector<2x1x1xf32>
    %28 = vector.broadcast %27 : vector<2x1x1xf32> to vector<2x4x1xf32>
    %29 = arith.mulf %24, %28 : vector<2x4x1xf32>
    %30 = vector.broadcast %29 : vector<2x4x1xf32> to vector<2x4x16xf32>
    %31 = arith.mulf %0, %30 : vector<2x4x16xf32>
    %cst_7 = arith.constant dense<0.000000e+00> : vector<2x16xf32>
    %32 = vector.multi_reduction <add>, %31, %cst_7 [1] : vector<2x4x16xf32> to vector<2x16xf32>
    %c0_8 = arith.constant 0 : index
    %c0_9 = arith.constant 0 : index
    %33 = vector.load %arg2[%c0_8, %c0_9] : memref<2x16xf32, #tpu.memory_space<vmem>>, vector<2x16xf32>
    tpu.vector_store %arg2[%c0_8, %c0_9], %32 {strides = array<i32>} : memref<2x16xf32, #tpu.memory_space<vmem>>, vector<2x16xf32>,
    %cst_10 = arith.constant dense<0.000000e+00> : vector<2x4xf32>
    %34 = vector.multi_reduction <add>, %29, %cst_10 [2] : vector<2x4x1xf32> to vector<2x4xf32>
    %c0_11 = arith.constant 0 : index
    %c0_12 = arith.constant 0 : index
    %35 = vector.load %arg3[%c0_11, %c0_12] : memref<2x4xf32, #tpu.memory_space<vmem>>, vector<2x4xf32>
    tpu.vector_store %arg3[%c0_11, %c0_12], %34 {strides = array<i32>} : memref<2x4xf32, #tpu.memory_space<vmem>>, vector<2x4xf32>,
    return
  }
  func.func @transform_0(%arg0: i32) -> (i32, i32, i32) {
    %c0_i32 = arith.constant 0 : i32
    %c0_i32_0 = arith.constant 0 : i32
    %c0_i32_1 = arith.constant 0 : i32
    return %arg0, %c0_i32, %c0_i32_0 : i32, i32, i32
  }
  func.func @transform_1(%arg0: i32) -> (i32, i32) {
    %c0_i32 = arith.constant 0 : i32
    %c0_i32_0 = arith.constant 0 : i32
    return %arg0, %c0_i32 : i32, i32
  }
  func.func @transform_2(%arg0: i32) -> (i32, i32) {
    %c0_i32 = arith.constant 0 : i32
    %c0_i32_0 = arith.constant 0 : i32
    return %arg0, %c0_i32 : i32, i32
  }
}

</mosaic_0001>

<llo_original>
// kernel: sweight_layer.1
$region0: #{sweight_layer.1}
  #allocation0 [shape = 'u32[]', space=smem, size = 0x4, offset = 0x4, fixed_abs, tag = 'smem constant byte address 0x4 - core index']
  #allocation1 [shape = 'u32[144,128]{1,0:T(1,128)}', space=vmem, size = 0x12000, scoped, tag = 'internal scratch']
  %s0 = inlined_call_operand.hbm [shape: f32[2,4,16], index: 0, kind: input, shape index: {}]
  %s1 = inlined_call_operand.hbm [shape: f32[2,16], index: 1, kind: output, shape index: {0}]
  %s2 = inlined_call_operand.hbm [shape: f32[2,4], index: 2, kind: output, shape index: {1}]
  %3 = xla_tuple %s1, %s2
  %s4 = sld [smem:[#allocation0]]
  $region26: #{sweight_layer.1} parent=0
    _
  %s6 = ssub.s32 1, %s4
  %s7 = scalar_select 0, %s6, %s4
  $region1: #{sweight_layer.1} parent=0
    #allocation2 [shape = 'u8[4096]{0}', space=vmem, size = 0x1000, scoped, tag = 'input window, operand 0, single buffered']
    #allocation3 [shape = 's32[1]{0}', space=sflag, size = 0x4, scoped, tag = 'scoped memory for sweight_layer.1']
    #allocation4 [shape = 's32[1]{0}', space=sflag, size = 0x4, scoped, tag = 'scoped memory for sweight_layer.1']
    #allocation5 [shape = 'u8[1024]{0}', space=vmem, size = 0x400, scoped, tag = 'output window, operand 0, single buffered']
    #allocation6 [shape = 'u8[1024]{0}', space=vmem, size = 0x400, scoped, tag = 'output window, operand 1, single buffered']
    #allocation7 [shape = 's32[1]{0}', space=sflag, size = 0x4, scoped, tag = 'scoped memory for sweight_layer.1']
    %8 = vsyncpa [#allocation3], 0
    %9 = vsyncpa [#allocation4], 0
    %10 = vsyncpa [#allocation7], 0
    // Predicated region
    $region2: #{sweight_layer.1} parent=1 // pred_check
      _
    $region3: #{sweight_layer.1} parent=1 // pred_check_branch
      %12 = sbr.rel (0) target = $region5
    $region4: #{sweight_layer.1} parent=1 // pred_region
      %s14 = ssub.s32 128, 128
      %15 = vsyncadd [#allocation3], %s14
      %s16 = sshll.u32 [#allocation2], 4
      %s17 = int_to_ptr.vmem [resolvable:$true] %s16
      %22 = dma.hbm_to_vmem [thread:$0]  %s0, 128, %s17, [#allocation3], 64, 64, 4
    $region5: #{sweight_layer.1} parent=1 // pred_fallthru
      _
    // Predicated region
    $region6: #{sweight_layer.1} parent=1 // pred_check
      _
    $region7: #{sweight_layer.1} parent=1 // pred_check_branch
      %24 = sbr.rel (0) target = $region9
    $region8: #{sweight_layer.1} parent=1 // pred_region
      %25 = dma.done [#allocation3], 128
    $region9: #{sweight_layer.1} parent=1 // pred_fallthru
      _
    %v26 = vld [vmem:[#allocation2] sm:$0xf]
    %v27 = vld [vmem:[#allocation2 + $0x4] sm:$0xf]
    %vm28 = vcmask 1047680
    %29 = vrot.lane.b32.xlu0 %v26, 16
    %v30 = vpop.permute.xlu0 %29
    %v31 = vsel %vm28, %v30, %v26
    %32 = vrot.lane.b32.xlu0 %v27, 16
    %v33 = vpop.permute.xlu0 %32
    %v34 = vsel %vm28, %v33, %v27
    %35 = vrot.lane.b32.xlu0 %v31, 16
    %v36 = vpop.permute.xlu0 %35
    %37 = vrot.lane.b32.xlu0 %v34, 16
    %v38 = vpop.permute.xlu0 %37
    %v39 = vsel %vm28, %v36, %v26
    %v40 = vsel %vm28, %v38, %v27
    %v41 = vlaneseq
    %v42 = vand.u32 %v41, 127
    %vm43 = vcmp.lt.s32.totalorder %v42, 15
    %v44 = vsel %vm43, 1, 0
    %v45 = vcvt.s32.f32 %v44
    %47 = vrot.lane.b32.xlu0 %v45, 1
    %v48 = vpop.permute.xlu0 %47
    %v50 = vmul.f32 %v39, %v48
    %v51 = vmul.f32 %v40, %v48
    %54 = vrot.lane.b32.xlu0 %v50, 127
    %v55 = vpop.permute.xlu0 %54
    %56 = vrot.lane.b32.xlu0 %v51, 127
    %v57 = vpop.permute.xlu0 %56
    %v60 = vadd.f32 %v26, %v55
    %v61 = vadd.f32 %v27, %v57
    %vm62 = vcmask 125952
    %v63 = vsel %vm62, %v60, -inf
    %64 = vmax.xlane.f32.xlu0 %v63
    %v65 = vpop.xlane.xlu0 %64
    %v66 = vsel %vm62, %v61, -inf
    %67 = vmax.xlane.f32.xlu0 %v66
    %v68 = vpop.xlane.xlu0 %67
    %v69 = vsel %vm62, %v26, 0.0
    %70 = vadd.xlane.f32.xlu0 %v69
    %v71 = vpop.xlane.xlu0 %70
    %v72 = vsel %vm62, %v27, 0.0
    %73 = vadd.xlane.f32.xlu0 %v72
    %v74 = vpop.xlane.xlu0 %73
    %v75 = vmul.f32 %v71, 2.0
    %v76 = vmul.f32 %v74, 2.0
    %v77 = vsub.f32 %v75, %v26
    %v78 = vsub.f32 %v76, %v27
    %v79 = vrcp.pop %v77
    %v80 = vrcp.pop %v78
    %v81 = vmul.f32 %v65, %v79
    %v82 = vmul.f32 %v68, %v80
    %vm83 = vcmask 3072
    %v84 = vsel %vm83, %v81, -inf
    %v85 = vrot.slane %v84, 4
    %v86 = vmax.f32 %v84, %v85
    %v87 = vrot.slane %v86, 2
    %v88 = vmax.f32 %v86, %v87
    %v89 = vrot.slane %v88, 1
    %v90 = vmax.f32 %v88, %v89
    %v91 = vsel %vm83, %v82, -inf
    %v92 = vrot.slane %v91, 4
    %v93 = vmax.f32 %v91, %v92
    %v94 = vrot.slane %v93, 2
    %v95 = vmax.f32 %v93, %v94
    %v96 = vrot.slane %v95, 1
    %v97 = vmax.f32 %v95, %v96
    %v98 = vsub.f32 %v81, %v90
    %v99 = vsub.f32 %v82, %v97
    %v100 = vmul.f32 %v98, 1.442695
    %v101 = vpow.pop %v100
    %v102 = vmul.f32 %v99, 1.442695
    %v103 = vpow.pop %v102
    %v104 = vsel %vm83, %v101, 0.0
    %v105 = vrot.slane %v104, 4
    %v106 = vadd.f32 %v104, %v105
    %v107 = vrot.slane %v106, 2
    %v108 = vadd.f32 %v106, %v107
    %v109 = vrot.slane %v108, 1
    %v110 = vadd.f32 %v108, %v109
    %v111 = vsel %vm83, %v103, 0.0
    %v112 = vrot.slane %v111, 4
    %v113 = vadd.f32 %v111, %v112
    %v114 = vrot.slane %v113, 2
    %v115 = vadd.f32 %v113, %v114
    %v116 = vrot.slane %v115, 1
    %v117 = vadd.f32 %v115, %v116
    %v118 = vrcp.pop %v110
    %v119 = vrcp.pop %v117
    %v120 = vmul.f32 %v101, %v118
    %v121 = vmul.f32 %v103, %v119
    %123 = vset.pattern.permute.xlu0 0
    %124 = vperm.xlu0 %123, %v120
    %v125 = vpop.permute.xlu0 %124
    %128 = vset.pattern.permute.xlu0 0
    %129 = vperm.xlu0 %128, %v121
    %v130 = vpop.permute.xlu0 %129
    %v132 = vmul.f32 %v26, %v125
    %v133 = vmul.f32 %v27, %v130
    %v134 = vsel %vm62, %v132, 0.0
    %v135 = vrot.slane %v134, 4
    %v136 = vadd.f32 %v134, %v135
    %v137 = vrot.slane %v136, 2
    %v138 = vadd.f32 %v136, %v137
    %v139 = vrot.slane %v138, 1
    %v140 = vadd.f32 %v138, %v139
    %v141 = vsel %vm62, %v133, 0.0
    %v142 = vrot.slane %v141, 4
    %v143 = vadd.f32 %v141, %v142
    %v144 = vrot.slane %v143, 2
    %v145 = vadd.f32 %v143, %v144
    %v146 = vrot.slane %v145, 1
    %v147 = vadd.f32 %v145, %v146
    %vm150 = vcmask 1041409
    %v151 = vsel %vm150, %v147, %v140
    %vm153 = vcmask 123904
    %154 = vst.msk [vmem:[#allocation5] sm:$0x3] %vm153, %v151
    %v155 = vadd.f32 %v120, 0.0
    %v156 = vadd.f32 %v121, 0.0
    %159 = vset.pattern.permute.xlu0 0
    %160 = vperm.xlu0 %159, %v155
    %v161 = vpop.permute.xlu0 %160
    %162 = vset.pattern.permute.xlu0 0
    %163 = vperm.xlu0 %162, %v156
    %v164 = vpop.permute.xlu0 %163
    %v165 = vlaneseq
    %v166 = vshrl.u32 %v165, 7
    %v167 = vsub.s32 %v42, %v166
    %v168 = vrot.slane %v161, %v167
    %v169 = vlaneseq
    %v170 = vshrl.u32 %v169, 7
    %v171 = vsub.s32 %v42, %v170
    %v172 = vrot.slane %v164, %v171
    %v173 = vsel %vm150, %v172, %v168
    %vm175 = vcmask 25600
    %176 = vst.msk [vmem:[#allocation6] sm:$0x3] %vm175, %v173
    // Predicated region
    $region10: #{sweight_layer.1} parent=1 // pred_check
      _
    $region11: #{sweight_layer.1} parent=1 // pred_check_branch
      %178 = sbr.rel (0) target = $region13
    $region12: #{sweight_layer.1} parent=1 // pred_region
      %s180 = ssub.s32 32, 32
      %181 = vsyncadd [#allocation4], %s180
      %s183 = sshll.u32 [#allocation5], 4
      %s184 = int_to_ptr.vmem [resolvable:$true] %s183
      %186 = dma.vmem_to_hbm [thread:$0]  %s184, 32, %s1, [#allocation4]
    $region13: #{sweight_layer.1} parent=1 // pred_fallthru
      _
    // Predicated region
    $region14: #{sweight_layer.1} parent=1 // pred_check
      _
    $region15: #{sweight_layer.1} parent=1 // pred_check_branch
      %188 = sbr.rel (0) target = $region17
    $region16: #{sweight_layer.1} parent=1 // pred_region
      %s190 = ssub.s32 32, 32
      %191 = vsyncadd [#allocation7], %s190
      %s193 = sshll.u32 [#allocation6], 4
      %s194 = int_to_ptr.vmem [resolvable:$true] %s193
      %196 = dma.vmem_to_hbm [thread:$0]  %s194, 32, %s2, [#allocation7]
    $region17: #{sweight_layer.1} parent=1 // pred_fallthru
      _
    // Predicated region
    $region18: #{sweight_layer.1} parent=1 // pred_check
      _
    $region19: #{sweight_layer.1} parent=1 // pred_check_branch
      %198 = sbr.rel (0) target = $region21
    $region20: #{sweight_layer.1} parent=1 // pred_region
      %199 = dma.done [#allocation4], 32
    $region21: #{sweight_layer.1} parent=1 // pred_fallthru
      _
    // Predicated region
    $region22: #{sweight_layer.1} parent=1 // pred_check
      _
    $region23: #{sweight_layer.1} parent=1 // pred_check_branch
      %201 = sbr.rel (0) target = $region25
    $region24: #{sweight_layer.1} parent=1 // pred_region
      %202 = dma.done [#allocation7], 32
    $region25: #{sweight_layer.1} parent=1 // pred_fallthru
      _
    %203 = vsyncpa [#allocation3], 1
    %204 = vsyncpa [#allocation4], 1
    %205 = vsyncpa [#allocation7], 1

</llo_original>
